<compile_context>
chip_gen: v7x
topology: tpu7x:2x2x1
jax: 0.10.0
libtpu: 0.0.40
codegen_flags: <defaults>
</compile_context>

<pallas_src>
import functools

import jax
import jax.numpy as jnp
from jax.experimental import pallas as pl
from jax.experimental.pallas import tpu as pltpu

_LANE = 128
_SUBLANE = 8
_VMEM_BUDGET = 20 * 1024 * 1024   # target working set (leaves headroom on v7x)
_VMEM_LIMIT = 32 * 1024 * 1024    # scoped-vmem limit handed to Mosaic


def _round_up(x: int, m: int) -> int:
    return ((x + m - 1) // m) * m


def _largest_aligned_divisor(total: int, cap: int, align: int) -> int:
    """Largest multiple of `align` that divides `total` and is <= cap.
    Falls back to `total` (full-extent blocks are always legal)."""
    if total <= cap:
        return total
    t = (cap // align) * align
    while t >= align:
        if total % t == 0:
            return t
        t -= align
    return total


def _dropout_threshold_i31(p: float) -> int:
    # keep  <=>  rand_i31 >= threshold, rand_i31 uniform in [0, 2^31)
    return min(int(round(float(p) * (1 << 31))), (1 << 31) - 1)


def _dropout_rand_i31(rng, shape):
    bits = jax.random.bits(rng, shape=shape, dtype=jnp.uint32)
    return jax.lax.shift_right_logical(bits, jnp.uint32(1)).astype(jnp.int32)


def _linear_embedder_kernel(*refs, dropout_threshold, inv_keep, scale_on_x,
                            use_bf16):
    if dropout_threshold is not None:
        x_ref, bits_ref, wt_ref, b_ref, o_ref, acc_ref = refs
    else:
        x_ref, wt_ref, b_ref, o_ref, acc_ref = refs
        bits_ref = None

    k_id = pl.program_id(1)

    @pl.when(k_id == 0)
    def _init():
        acc_ref[...] = jnp.zeros_like(acc_ref)

    x = x_ref[...]
    if bits_ref is not None:
        # Integer-domain keep test (no float conversion of the random bits).
        keep = bits_ref[...] >= jnp.int32(dropout_threshold)
        if scale_on_x:
            x = jnp.where(keep, x * jnp.asarray(inv_keep, x.dtype),
                          jnp.zeros_like(x))
        else:
            x = jnp.where(keep, x, jnp.zeros_like(x))

    w = wt_ref[...]
    if use_bf16:
        # Optional MXU-throughput win on v6e/v7x (keep f32 accumulation).
        x = x.astype(jnp.bfloat16)
        w = w.astype(jnp.bfloat16)

    acc_ref[...] += jnp.dot(x, w, preferred_element_type=jnp.float32)

    @pl.when(k_id == pl.num_programs(1) - 1)
    def _finalize():
        y = acc_ref[...]
        if (bits_ref is not None) and (not scale_on_x):
            y = y * jnp.float32(inv_keep)
        o_ref[...] = (y + b_ref[...]).astype(o_ref.dtype)


def prepare_linear_embedder_params(weight, bias):
    """One-time parameter prep (do this OUTSIDE the training/inference loop):
    transpose weight to [input_size, dim] and zero-pad the output width up to
    a multiple of 128 lanes for lane-dense stores."""
    dim, input_size = weight.shape
    assert bias.shape == (dim,)
    n_pad = _round_up(dim, _LANE)
    wt = jnp.zeros((input_size, n_pad), weight.dtype).at[:, :dim].set(weight.T)
    b2 = jnp.zeros((1, n_pad), bias.dtype).at[0, :dim].set(bias)
    return wt, b2, dim


def linear_embedder_forward(x, wt, b2, out_dim, *, dropout_p: float = 0.0,
                            training: bool = False, rng=None,
                            use_bf16_matmul: bool = False):
    """y = Dropout_p(x) @ weight.T + bias (dropout active only if training).
    (wt, b2, out_dim) come from prepare_linear_embedder_params."""
    batch, input_size = x.shape
    k_total, n_pad = wt.shape
    assert k_total == input_size and b2.shape == (1, n_pad)
    assert 0.0 <= dropout_p < 1.0, "dropout_p must be in [0, 1)"

    use_dropout = bool(training) and dropout_p > 0.0
    x_bytes = jnp.dtype(x.dtype).itemsize
    w_bytes = jnp.dtype(wt.dtype).itemsize

    # ---- tile selection under a conservative VMEM budget -------------------
    kt_cap = max(_LANE, (8 * 1024 * 1024) // (2 * n_pad * w_bytes))
    kt = _largest_aligned_divisor(input_size, kt_cap, _LANE)

    weight_cost = 2 * kt * n_pad * w_bytes + 2 * n_pad * 4            # W^T, bias
    per_row = 2 * kt * x_bytes                                        # x
    per_row += (2 * kt * 4) if use_dropout else 0                     # bits
    per_row += 2 * n_pad * x_bytes + n_pad * 4                        # out + acc
    bt_cap = max(_SUBLANE, (_VMEM_BUDGET - weight_cost) // per_row)
    bt = _largest_aligned_divisor(batch, int(min(512, bt_cap)), _SUBLANE)

    grid = (batch // bt, input_size // kt)

    x_spec = pl.BlockSpec((bt, kt), lambda i, k: (i, k))
    wt_spec = pl.BlockSpec((kt, n_pad), lambda i, k: (k, 0))
    b_spec = pl.BlockSpec((1, n_pad), lambda i, k: (0, 0))
    out_spec = pl.BlockSpec((bt, n_pad), lambda i, k: (i, 0))

    if use_dropout:
        if rng is None:
            rng = jax.random.PRNGKey(0)
        # TODO(synk): torch.nn.Dropout's RNG stream is not reproduced; only the
        # dropout semantics (per-element keep prob 1-p, inverted scaling) match.
        bits = _dropout_rand_i31(rng, x.shape)
        threshold = _dropout_threshold_i31(dropout_p)
        inv_keep = 1.0 / (1.0 - float(dropout_p))
        in_specs = [x_spec, pl.BlockSpec((bt, kt), lambda i, k: (i, k)),
                    wt_spec, b_spec]
        inputs = (x, bits, wt, b2)
    else:
        threshold = None
        inv_keep = 1.0
        in_specs = [x_spec, wt_spec, b_spec]
        inputs = (x, wt, b2)

    kernel = functools.partial(
        _linear_embedder_kernel,
        dropout_threshold=threshold,
        inv_keep=float(inv_keep),
        scale_on_x=bool(input_size <= n_pad),   # scale whichever side is smaller
        use_bf16=bool(use_bf16_matmul),
    )

    y = pl.pallas_call(
        kernel,
        out_shape=jax.ShapeDtypeStruct((batch, n_pad), x.dtype),
        grid=grid,
        in_specs=in_specs,
        out_specs=out_spec,
        scratch_shapes=[pltpu.VMEM((bt, n_pad), jnp.float32)],
        compiler_params=pltpu.CompilerParams(
            dimension_semantics=("parallel", "arbitrary"),
            vmem_limit_bytes=_VMEM_LIMIT,
        ),
    )(*inputs)

    return y[:, :out_dim] if out_dim != n_pad else y


def linear_embedder(x, weight, bias, *, dropout_p: float = 0.0,
                    training: bool = False, rng=None,
                    use_bf16_matmul: bool = False):
    """Convenience one-shot wrapper. In a loop, prefer
    prepare_linear_embedder_params(...) once + linear_embedder_forward(...)
    so the weight transpose/pad is not re-materialized every call."""
    wt, b2, dim = prepare_linear_embedder_params(weight, bias)
    return linear_embedder_forward(x, wt, b2, dim, dropout_p=dropout_p,
                                   training=training, rng=rng,
                                   use_bf16_matmul=use_bf16_matmul)


if __name__ == "__main__":
    # Small shapes consistent with LinearEmbedder(input_size, dim, dropout).
    batch, input_size, dim = 8, 32, 16
    dropout_p = 0.1

    key = jax.random.PRNGKey(0)
    kx, kw, kb, kd = jax.random.split(key, 4)

    x = jax.random.normal(kx, (batch, input_size), dtype=jnp.float32)
    bound = 1.0 / (input_size ** 0.5)
    weight = jax.random.uniform(kw, (dim, input_size), dtype=jnp.float32,
                                minval=-bound, maxval=bound)
    bias = jax.random.uniform(kb, (dim,), dtype=jnp.float32,
                              minval=-bound, maxval=bound)

    # One-time param prep (pre-transposed + lane-padded).
    wt, b2, out_dim = prepare_linear_embedder_params(weight, bias)

    # Eval mode: dropout is identity -> must match the dense reference.
    y = linear_embedder_forward(x, wt, b2, out_dim, dropout_p=dropout_p,
                                training=False)
    y = jax.block_until_ready(y)
    y_ref = x @ weight.T + bias
    assert y.shape == (batch, dim)
    assert jnp.allclose(y, y_ref, atol=1e-5, rtol=1e-5), "eval mismatch"

    # Training mode: verify against a plain-JAX reference using the exact same
    # random bits and threshold.
    y_train = linear_embedder_forward(x, wt, b2, out_dim, dropout_p=dropout_p,
                                      training=True, rng=kd)
    y_train = jax.block_until_ready(y_train)
    keep_ref = _dropout_rand_i31(kd, x.shape) >= _dropout_threshold_i31(dropout_p)
    x_drop = jnp.where(keep_ref, x / (1.0 - dropout_p), 0.0)
    y_train_ref = x_drop @ weight.T + bias
    assert y_train.shape == (batch, dim)
    assert jnp.allclose(y_train, y_train_ref, atol=1e-4, rtol=1e-4), \
        "train mismatch"

    print("KERNEL_OK")
</pallas_src>

<mosaic_0001>
module attributes {stable_mosaic.version = 11 : i64} {
  func.func @_linear_embedder_kernel(%arg0: i32, %arg1: i32, %arg2: memref<8x32xf32, #tpu.memory_space<vmem>>, %arg3: memref<32x128xf32, #tpu.memory_space<vmem>>, %arg4: memref<1x128xf32, #tpu.memory_space<vmem>>, %arg5: memref<8x128xf32, #tpu.memory_space<vmem>>, %arg6: memref<8x128xf32, #tpu.memory_space<vmem>>) attributes {dimension_semantics = [#tpu.dimension_semantics<parallel>, #tpu.dimension_semantics<arbitrary>], iteration_bounds = array<i64: 1, 1>, scalar_prefetch = 0 : i64, scratch_operands = 1 : i64, tpu.core_type = #tpu.core_type<tc>, window_params = [{transform_indices = @transform_0, window_bounds = array<i64: 8, 32>}, {transform_indices = @transform_1, window_bounds = array<i64: 32, 128>}, {pipeline_mode = #tpu.pipeline_mode<synchronous>, transform_indices = @transform_2, window_bounds = array<i64: 1, 128>}, {transform_indices = @transform_3, window_bounds = array<i64: 8, 128>}]} {
    %c0_i32 = arith.constant 0 : i32
    %0 = arith.cmpi eq, %arg1, %c0_i32 : i32
    %1 = arith.extui %0 : i1 to i32
    %c0_i32_0 = arith.constant 0 : i32
    %2 = arith.cmpi ne, %1, %c0_i32_0 : i32
    scf.if %2 {
      %cst_10 = arith.constant 0.000000e+00 : f32
      %12 = vector.broadcast %cst_10 : f32 to vector<8x128xf32>
      %c0_11 = arith.constant 0 : index
      %c0_12 = arith.constant 0 : index
      %13 = vector.load %arg6[%c0_11, %c0_12] : memref<8x128xf32, #tpu.memory_space<vmem>>, vector<8x128xf32>
      tpu.vector_store %arg6[%c0_11, %c0_12], %12 {strides = array<i32>} : memref<8x128xf32, #tpu.memory_space<vmem>>, vector<8x128xf32>,
    } else {
    }
    %c0 = arith.constant 0 : index
    %c0_1 = arith.constant 0 : index
    %3 = vector.load %arg2[%c0, %c0_1] : memref<8x32xf32, #tpu.memory_space<vmem>>, vector<8x32xf32>
    %c0_2 = arith.constant 0 : index
    %c0_3 = arith.constant 0 : index
    %4 = vector.load %arg3[%c0_2, %c0_3] : memref<32x128xf32, #tpu.memory_space<vmem>>, vector<32x128xf32>
    %c0_4 = arith.constant 0 : index
    %c0_5 = arith.constant 0 : index
    %5 = vector.load %arg6[%c0_4, %c0_5] : memref<8x128xf32, #tpu.memory_space<vmem>>, vector<8x128xf32>
    %cst = arith.constant dense<0.000000e+00> : vector<8x128xf32>
    %6 = tpu.matmul %3, %4, %cst {dimension_numbers = #tpu.dot_dimension_numbers<[1], [0], [0], [1], [0, 0, 1, 1], [], []>} : vector<8x32xf32>, vector<32x128xf32>, vector<8x128xf32> -> vector<8x128xf32>
    %7 = arith.addf %5, %6 : vector<8x128xf32>
    %c0_6 = arith.constant 0 : index
    %c0_7 = arith.constant 0 : index
    %8 = vector.load %arg6[%c0_6, %c0_7] : memref<8x128xf32, #tpu.memory_space<vmem>>, vector<8x128xf32>
    tpu.vector_store %arg6[%c0_6, %c0_7], %7 {strides = array<i32>} : memref<8x128xf32, #tpu.memory_space<vmem>>, vector<8x128xf32>,
    %c0_i32_8 = arith.constant 0 : i32
    %9 = arith.cmpi eq, %arg1, %c0_i32_8 : i32
    %10 = arith.extui %9 : i1 to i32
    %c0_i32_9 = arith.constant 0 : i32
    %11 = arith.cmpi ne, %10, %c0_i32_9 : i32
    scf.if %11 {
      %c0_10 = arith.constant 0 : index
      %c0_11 = arith.constant 0 : index
      %12 = vector.load %arg6[%c0_10, %c0_11] : memref<8x128xf32, #tpu.memory_space<vmem>>, vector<8x128xf32>
      %c0_12 = arith.constant 0 : index
      %c0_13 = arith.constant 0 : index
      %13 = vector.load %arg4[%c0_12, %c0_13] : memref<1x128xf32, #tpu.memory_space<vmem>>, vector<1x128xf32>
      %14 = vector.broadcast %13 : vector<1x128xf32> to vector<8x128xf32>
      %15 = arith.addf %12, %14 : vector<8x128xf32>
      %c0_14 = arith.constant 0 : index
      %c0_15 = arith.constant 0 : index
      %16 = vector.load %arg5[%c0_14, %c0_15] : memref<8x128xf32, #tpu.memory_space<vmem>>, vector<8x128xf32>
      tpu.vector_store %arg5[%c0_14, %c0_15], %15 {strides = array<i32>} : memref<8x128xf32, #tpu.memory_space<vmem>>, vector<8x128xf32>,
    } else {
    }
    return
  }
  func.func @transform_0(%arg0: i32, %arg1: i32) -> (i32, i32) {
    %c0_i32 = arith.constant 0 : i32
    return %arg0, %arg1 : i32, i32
  }
  func.func @transform_1(%arg0: i32, %arg1: i32) -> (i32, i32) {
    %c0_i32 = arith.constant 0 : i32
    %c0_i32_0 = arith.constant 0 : i32
    return %arg1, %c0_i32 : i32, i32
  }
  func.func @transform_2(%arg0: i32, %arg1: i32) -> (i32, i32) {
    %c0_i32 = arith.constant 0 : i32
    %c0_i32_0 = arith.constant 0 : i32
    %c0_i32_1 = arith.constant 0 : i32
    return %c0_i32, %c0_i32_0 : i32, i32
  }
  func.func @transform_3(%arg0: i32, %arg1: i32) -> (i32, i32) {
    %c0_i32 = arith.constant 0 : i32
    %c0_i32_0 = arith.constant 0 : i32
    return %arg0, %c0_i32 : i32, i32
  }
}

</mosaic_0001>

<llo_original>
// kernel: tpu_custom_call.1
$region0: #{tpu_custom_call.1}
  #allocation0 [shape = 'u32[]', space=smem, size = 0x4, offset = 0x4, fixed_abs, tag = 'smem constant byte address 0x4 - core index']
  #allocation1 [shape = 'u32[144,128]{1,0:T(1,128)}', space=vmem, size = 0x12000, scoped, tag = 'internal scratch']
  #allocation2 [shape = 'f32[8,128]{1,0:T(8,128)}', space=vmem, size = 0x1000, scoped, tag = 'scratch operand']
  %s0 = inlined_call_operand.hbm [shape: f32[8,32], index: 0, kind: input, shape index: {}]
  %s1 = inlined_call_operand.hbm [shape: f32[32,128], index: 1, kind: input, shape index: {}]
  %s2 = inlined_call_operand.vmem [shape: f32[1,128], index: 2, kind: input, shape index: {}]
  %s3 = inlined_call_operand.hbm [shape: f32[8,128], index: 3, kind: output, shape index: {}]
  %s4 = sld [smem:[#allocation0]]
  $region38: #{tpu_custom_call.1} parent=0
    _
  %s6 = ssub.s32 1, %s4
  %s7 = scalar_select 0, %s6, %s4
  $region1: #{tpu_custom_call.1} parent=0
    #allocation3 [shape = 'u8[4096]{0}', space=vmem, size = 0x1000, scoped, tag = 'input window, operand 0, single buffered']
    #allocation4 [shape = 's32[1]{0}', space=sflag, size = 0x4, scoped, tag = 'scoped memory for tpu_custom_call.1']
    #allocation5 [shape = 's32[1]{0}', space=sflag, size = 0x4, scoped, tag = 'scoped memory for tpu_custom_call.1']
    #allocation6 [shape = 'u8[16384]{0}', space=vmem, size = 0x4000, scoped, tag = 'input window, operand 1, single buffered']
    #allocation7 [shape = 's32[1]{0}', space=sflag, size = 0x4, scoped, tag = 'scoped memory for tpu_custom_call.1']
    #allocation8 [shape = 'u8[4096]{0}', space=vmem, size = 0x1000, scoped, tag = 'output window, operand 0, single buffered']
    %8 = vsyncpa [#allocation4], 0
    %9 = vsyncpa [#allocation7], 0
    %10 = vsyncpa [#allocation5], 0
    // Predicated region
    $region2: #{tpu_custom_call.1} parent=1 // pred_check
      _
    $region3: #{tpu_custom_call.1} parent=1 // pred_check_branch
      %12 = sbr.rel (0) target = $region5
    $region4: #{tpu_custom_call.1} parent=1 // pred_region
      %s14 = ssub.s32 128, 128
      %15 = vsyncadd [#allocation4], %s14
      %s17 = sshll.u32 [#allocation3], 4
      %s18 = int_to_ptr.vmem [resolvable:$true] %s17
      %20 = dma.hbm_to_vmem [thread:$0]  %s0, 128, %s18, [#allocation4]
    $region5: #{tpu_custom_call.1} parent=1 // pred_fallthru
      _
    // Predicated region
    $region6: #{tpu_custom_call.1} parent=1 // pred_check
      _
    $region7: #{tpu_custom_call.1} parent=1 // pred_check_branch
      %22 = sbr.rel (0) target = $region9
    $region8: #{tpu_custom_call.1} parent=1 // pred_region
      %s24 = ssub.s32 512, 512
      %25 = vsyncadd [#allocation7], %s24
      %s26 = sshll.u32 [#allocation6], 4
      %s27 = int_to_ptr.vmem [resolvable:$true] %s26
      %32 = dma.hbm_to_vmem [thread:$0]  %s1, 512, %s27, [#allocation7], 128, 128, 8
    $region9: #{tpu_custom_call.1} parent=1 // pred_fallthru
      _
    // Predicated region
    $region10: #{tpu_custom_call.1} parent=1 // pred_check
      _
    $region11: #{tpu_custom_call.1} parent=1 // pred_check_branch
      %34 = sbr.rel (0) target = $region13
    $region12: #{tpu_custom_call.1} parent=1 // pred_region
      _
    $region13: #{tpu_custom_call.1} parent=1 // pred_fallthru
      _
    // Predicated region
    $region14: #{tpu_custom_call.1} parent=1 // pred_check
      _
    $region15: #{tpu_custom_call.1} parent=1 // pred_check_branch
      %36 = sbr.rel (0) target = $region17
    $region16: #{tpu_custom_call.1} parent=1 // pred_region
      %37 = dma.done [#allocation4], 128
    $region17: #{tpu_custom_call.1} parent=1 // pred_fallthru
      _
    // Predicated region
    $region18: #{tpu_custom_call.1} parent=1 // pred_check
      _
    $region19: #{tpu_custom_call.1} parent=1 // pred_check_branch
      %39 = sbr.rel (0) target = $region21
    $region20: #{tpu_custom_call.1} parent=1 // pred_region
      %40 = dma.done [#allocation7], 512
    $region21: #{tpu_custom_call.1} parent=1 // pred_fallthru
      _
    %p41 = scmp.eq.s32.totalorder 0, 0
    // Predicated region
    $region22: #{tpu_custom_call.1} parent=1 // pred_check
      %p42 = pneg %p41
    $region23: #{tpu_custom_call.1} parent=1 // pred_check_branch
      %44 = sbr.rel (%p42) target = $region25
    $region24: #{tpu_custom_call.1} parent=1 // pred_region
      %45 = vst [vmem:[#allocation2] sm:$0xff] 0.0
    $region25: #{tpu_custom_call.1} parent=1 // pred_fallthru
      _
    %v46 = vld [vmem:[#allocation3] sm:$0xff]
    %v47 = vld [vmem:[#allocation6] sm:$0xff]
    %v48 = vld [vmem:[#allocation6 + $0x8] sm:$0xff]
    %v49 = vld [vmem:[#allocation6 + $0x10] sm:$0xff]
    %v50 = vld [vmem:[#allocation6 + $0x18] sm:$0xff]
    %v51 = vld [vmem:[#allocation2] sm:$0xff]
    %vm52 = vcmask 261120
    %v54 = vsel %vm52, %v46, 0
    %56 = vmatprep.subr.mxu0 0.0
    %57 = vmatpush1.msra.mxu0 %v47
    %58 = vmatprep.subr.mxu0 0.0
    %59 = vmatpush1.msra.mxu0 %v48
    %60 = vmatprep.subr.mxu0 0.0
    %61 = vmatpush1.msra.mxu0 %v49
    %62 = vmatprep.subr.mxu0 0.0
    %63 = vmatpush1.msra.mxu0 %v50
    %64 = vmatprep.subr.mxu0 0.0
    %65 = vmatpush1.msra.mxu0 0.0
    %66 = vmatprep.subr.mxu0 0.0
    %67 = vmatpush1.msra.mxu0 0.0
    %68 = vmatprep.subr.mxu0 0.0
    %69 = vmatpush1.msra.mxu0 0.0
    %70 = vmatprep.subr.mxu0 0.0
    %71 = vmatpush1.msra.mxu0 0.0
    %72 = vmatprep.subr.mxu0 0.0
    %73 = vmatpush1.msra.mxu0 0.0
    %74 = vmatprep.subr.mxu0 0.0
    %75 = vmatpush1.msra.mxu0 0.0
    %76 = vmatprep.subr.mxu0 0.0
    %77 = vmatpush1.msra.mxu0 0.0
    %78 = vmatprep.subr.mxu0 0.0
    %79 = vmatpush1.msra.mxu0 0.0
    %80 = vmatprep.subr.mxu0 0.0
    %81 = vmatpush1.msra.mxu0 0.0
    %82 = vmatprep.subr.mxu0 0.0
    %83 = vmatpush1.msra.mxu0 0.0
    %84 = vmatprep.subr.mxu0 0.0
    %85 = vmatpush1.msra.mxu0 0.0
    %86 = vmatprep.subr.mxu0 0.0
    %87 = vmatpush1.msra.mxu0 0.0
    %88 = vmatprep.subr.mxu0 0.0
    %89 = vmatpush1.msra.mxu0 0.0
    %90 = vmatprep.subr.mxu0 0.0
    %91 = vmatpush1.msra.mxu0 0.0
    %92 = vmatprep.subr.mxu0 0.0
    %93 = vmatpush1.msra.mxu0 0.0
    %94 = vmatprep.subr.mxu0 0.0
    %95 = vmatpush1.msra.mxu0 0.0
    %96 = vmatprep.subr.mxu0 0.0
    %97 = vmatpush1.msra.mxu0 0.0
    %98 = vmatprep.subr.mxu0 0.0
    %99 = vmatpush1.msra.mxu0 0.0
    %100 = vmatprep.subr.mxu0 0.0
    %101 = vmatpush1.msra.mxu0 0.0
    %102 = vmatprep.subr.mxu0 0.0
    %103 = vmatpush1.msra.mxu0 0.0
    %104 = vmatprep.subr.mxu0 0.0
    %105 = vmatpush1.msra.mxu0 0.0
    %106 = vmatprep.subr.mxu0 0.0
    %107 = vmatpush1.msra.mxu0 0.0
    %108 = vmatprep.subr.mxu0 0.0
    %109 = vmatpush1.msra.mxu0 0.0
    %110 = vmatprep.subr.mxu0 0.0
    %111 = vmatpush1.msra.mxu0 0.0
    %112 = vmatprep.subr.mxu0 0.0
    %113 = vmatpush1.msra.mxu0 0.0
    %114 = vmatprep.subr.mxu0 0.0
    %115 = vmatpush1.msra.mxu0 0.0
    %116 = vmatprep.subr.mxu0 0.0
    %117 = vmatpush1.msra.mxu0 0.0
    %118 = vmatprep.subr.mxu0 0.0
    %119 = vmatpush1.msra.mxu0 0.0
    %120 = vmatprep.mubr.f32.mxu0 0.0
    %121 = vmatmul.mubr.f32.gmra.mrb[0].mxu0 %v54
    %v122 = vpop.f32.mrb[0].mxu0
    %v123 = vadd.f32 0.0, %v122
    %v124 = vpop.f32.mrb[0].mxu0
    %125 = vdwg.mxu0
    %v126 = vadd.f32 %v51, %v123
    %127 = vst [vmem:[#allocation2] sm:$0xff] %v126
    // Predicated region
    $region26: #{tpu_custom_call.1} parent=1 // pred_check
      %p128 = pneg %p41
    $region27: #{tpu_custom_call.1} parent=1 // pred_check_branch
      %130 = sbr.rel (%p128) target = $region29
    $region28: #{tpu_custom_call.1} parent=1 // pred_region
      %v131 = vld [vmem:[#allocation2] sm:$0xff]
      %v132 = vld [vmem:[%s2] sm:$0x1]
      %v134 = vlaneseq
      %v135 = vshrl.u32 %v134, 7
      %v136 = vsub.s32 0, %v135
      %v137 = vrot.slane %v132, %v136
      %v139 = vadd.f32 %v131, %v137
      %140 = vst [vmem:[#allocation8] sm:$0xff] %v139
    $region29: #{tpu_custom_call.1} parent=1 // pred_fallthru
      _
    // Predicated region
    $region30: #{tpu_custom_call.1} parent=1 // pred_check
      _
    $region31: #{tpu_custom_call.1} parent=1 // pred_check_branch
      %142 = sbr.rel (0) target = $region33
    $region32: #{tpu_custom_call.1} parent=1 // pred_region
      %s144 = ssub.s32 128, 128
      %145 = vsyncadd [#allocation5], %s144
      %s147 = sshll.u32 [#allocation8], 4
      %s148 = int_to_ptr.vmem [resolvable:$true] %s147
      %150 = dma.vmem_to_hbm [thread:$0]  %s148, 128, %s3, [#allocation5]
    $region33: #{tpu_custom_call.1} parent=1 // pred_fallthru
      _
    // Predicated region
    $region34: #{tpu_custom_call.1} parent=1 // pred_check
      _
    $region35: #{tpu_custom_call.1} parent=1 // pred_check_branch
      %152 = sbr.rel (0) target = $region37
    $region36: #{tpu_custom_call.1} parent=1 // pred_region
      %153 = dma.done [#allocation5], 128
    $region37: #{tpu_custom_call.1} parent=1 // pred_fallthru
      _
    %154 = vsyncpa [#allocation4], 1
    %155 = vsyncpa [#allocation7], 1
    %156 = vsyncpa [#allocation5], 1

</llo_original>
